<compile_context>
chip_gen: v7x
topology: tpu7x:2x2x1
jax: 0.10.0
libtpu: 0.0.40
codegen_flags: <defaults>
</compile_context>

<pallas_src>
import math
from functools import partial

import jax
import jax.numpy as jnp
from jax import lax
from jax.experimental import pallas as pl
from jax.experimental.pallas import tpu as pltpu


def _round_up(x, m):
    return ((x + m - 1) // m) * m


def mine_kernel(x_ref, w1_ref, b1_ref, w2_ref, b2_ref, w3_ref, b3_ref, o_ref):
    # Layer 1: Linear(D1+D2, 128) + ReLU.  The torch.cat is already fused in the
    # wrapper, so this is a single MXU matmul with f32 accumulation.
    h1 = jnp.dot(x_ref[...], w1_ref[...], preferred_element_type=jnp.float32)
    h1 = jnp.maximum(h1 + b1_ref[...], 0.0)              # f32 bias + ReLU (VPU)

    # Layer 2: Linear(128, 128) + ReLU (MXU matmul, f32 accumulation).
    h2 = jnp.dot(h1.astype(w2_ref.dtype), w2_ref[...],
                 preferred_element_type=jnp.float32)
    h2 = jnp.maximum(h2 + b2_ref[...], 0.0)

    # Layer 3: Linear(128, 1), computed directly in lane-dense row space:
    #     (1, 128) . contract_h . (TB, 128)  ->  (1, TB)
    # so the batch lands on the lane axis and the store is an unmasked full-lane
    # vst (no (TB,1) column output, no sublane->lane relayout).
    out_row = lax.dot_general(
        w3_ref[...], h2.astype(w3_ref.dtype),
        dimension_numbers=(((1,), (1,)), ((), ())),
        preferred_element_type=jnp.float32)               # (1, TB) f32
    out_row = out_row + b3_ref[...]                       # (1, 1) lane-broadcast
    o_ref[...] = out_row.reshape(1, 1, -1).astype(o_ref.dtype)


def prepare_params(params, compute_dtype=jnp.bfloat16):
    """Cast/reshape (w1, b1, w2, b2, w3, b3) once, outside the training step."""
    w1, b1, w2, b2, w3, b3 = params
    H = w1.shape[1]
    return (
        w1.astype(compute_dtype),                 # (D1+D2, H)
        b1.reshape(1, H).astype(jnp.float32),     # (1, H)
        w2.astype(compute_dtype),                 # (H, H)
        b2.reshape(1, H).astype(jnp.float32),     # (1, H)
        w3.reshape(1, H).astype(compute_dtype),   # layer-3 weight as a (1, H) row
        b3.reshape(1, 1).astype(jnp.float32),     # (1, 1)
    )


@partial(jax.jit, static_argnames=("block_b",))
def mine_forward_prepared(dis_1, dis_2, prepped, *, block_b=512):
    w1, b1, w2, b2, w3, b3 = prepped
    B = dis_1.shape[0]
    D = dis_1.shape[1] + dis_2.shape[1]
    H = w1.shape[1]

    # Fuse torch.cat here: one dense (B, D1+D2) input stream for the kernel.
    x = jnp.concatenate([dis_1, dis_2], axis=1).astype(w1.dtype)

    # Batch tile: multiple of 8 sublanes, large by default, but keep >= 2 grid
    # steps (when B >= 16) so v7x megacore can split the batch across both TCs.
    TB = min(block_b, _round_up(B, 8))
    if B >= 16 and _round_up(B, TB) // TB < 2:
        TB = _round_up(-(-B // 2), 8)
    B_pad = _round_up(B, TB)
    if B_pad != B:
        x = jnp.pad(x, ((0, B_pad - B), (0, 0)))   # zero rows -> sliced off below
    num_tiles = B_pad // TB

    def const_spec(shape):
        # Constant index_map -> block DMA'd once, VMEM-resident across grid steps.
        return pl.BlockSpec(shape, lambda i: (0, 0))

    out = pl.pallas_call(
        mine_kernel,
        out_shape=jax.ShapeDtypeStruct((num_tiles, 1, TB), jnp.float32),
        grid=(num_tiles,),
        in_specs=[
            pl.BlockSpec((TB, D), lambda i: (i, 0)),   # streamed batch tile
            const_spec((D, H)),                        # W1
            const_spec((1, H)),                        # b1
            const_spec((H, H)),                        # W2
            const_spec((1, H)),                        # b2
            const_spec((1, H)),                        # W3 as a row
            const_spec((1, 1)),                        # b3
        ],
        out_specs=pl.BlockSpec((1, 1, TB), lambda i: (i, 0, 0)),  # lane-dense rows
        compiler_params=pltpu.CompilerParams(
            dimension_semantics=("parallel",),         # megacore sharding on v7x
        ),
    )(x, w1, b1, w2, b2, w3, b3)

    # (num_tiles, 1, TB) row-major flatten == batch order; drop padding rows.
    return out.reshape(B_pad, 1)[:B]


def mine_forward(dis_1, dis_2, params, *, compute_dtype=jnp.bfloat16, block_b=512):
    """MINE.forward: concat -> Linear+ReLU -> Linear+ReLU -> Linear(128,1)."""
    # For training loops, call prepare_params() once and reuse the result with
    # mine_forward_prepared() to avoid per-step weight cast/reshape ops.
    return mine_forward_prepared(
        dis_1, dis_2, prepare_params(params, compute_dtype), block_b=block_b)


def init_mine_params(key, total_dim, hidden=128, out_dim=1):
    """Deterministic init mimicking torch.nn.Linear's uniform(-1/sqrt(fan_in), ...)."""
    def linear(k, fan_in, fan_out):
        kw, kb = jax.random.split(k)
        bound = 1.0 / math.sqrt(fan_in)
        w = jax.random.uniform(kw, (fan_in, fan_out), jnp.float32, -bound, bound)
        b = jax.random.uniform(kb, (1, fan_out), jnp.float32, -bound, bound)
        return w, b

    k1, k2, k3 = jax.random.split(key, 3)
    w1, b1 = linear(k1, total_dim, hidden)
    w2, b2 = linear(k2, hidden, hidden)
    w3, b3 = linear(k3, hidden, out_dim)
    return (w1, b1, w2, b2, w3, b3)


def mine_reference(dis_1, dis_2, params):
    """Pure-JAX f32 reference for correctness checking."""
    x = jnp.concatenate([dis_1, dis_2], axis=1)
    w1, b1, w2, b2, w3, b3 = params
    h1 = jnp.maximum(x @ w1 + b1, 0.0)
    h2 = jnp.maximum(h1 @ w2 + b2, 0.0)
    return h2 @ w3 + b3


if __name__ == "__main__":
    key = jax.random.PRNGKey(0)
    k_p, k_a, k_b, k_c, k_d = jax.random.split(key, 5)

    D1, D2 = 16, 16
    params = init_mine_params(k_p, D1 + D2)

    # Case 1: default bf16 matmul path; B=32 exercises the >=2-grid-step tiling
    # (TB=16, 2 steps) and lane-dense output writeback.
    B = 32
    dis_1 = jax.random.normal(k_a, (B, D1), jnp.float32)
    dis_2 = jax.random.normal(k_b, (B, D2), jnp.float32)
    ref = mine_reference(dis_1, dis_2, params)
    out_bf16 = jax.block_until_ready(mine_forward(dis_1, dis_2, params))
    assert out_bf16.shape == (B, 1), out_bf16.shape
    assert jnp.allclose(out_bf16, ref, atol=1.5e-1, rtol=0.0), "bf16 mismatch vs reference"

    # Case 2: f32 fallback path (tighter tolerance; MXU f32 matmul may use bf16 passes).
    out_f32 = jax.block_until_ready(
        mine_forward(dis_1, dis_2, params, compute_dtype=jnp.float32))
    assert out_f32.shape == (B, 1), out_f32.shape
    assert jnp.allclose(out_f32, ref, atol=2e-2, rtol=2e-2), "f32 mismatch vs reference"

    # Case 3: ragged batch (padding + 2-step grid), f32 path.
    B2 = 20
    dis_1b = jax.random.normal(k_c, (B2, D1), jnp.float32)
    dis_2b = jax.random.normal(k_d, (B2, D2), jnp.float32)
    out2 = jax.block_until_ready(
        mine_forward(dis_1b, dis_2b, params, compute_dtype=jnp.float32))
    ref2 = mine_reference(dis_1b, dis_2b, params)
    assert out2.shape == (B2, 1), out2.shape
    assert jnp.allclose(out2, ref2, atol=2e-2, rtol=2e-2), "ragged f32 mismatch"

    print("KERNEL_OK")
</pallas_src>

<mosaic_0001>
module attributes {stable_mosaic.version = 11 : i64} {
  func.func @mine_kernel(%arg0: i32, %arg1: memref<16x32xbf16, #tpu.memory_space<vmem>>, %arg2: memref<32x128xbf16, #tpu.memory_space<vmem>>, %arg3: memref<1x128xf32, #tpu.memory_space<vmem>>, %arg4: memref<128x128xbf16, #tpu.memory_space<vmem>>, %arg5: memref<1x128xf32, #tpu.memory_space<vmem>>, %arg6: memref<1x128xbf16, #tpu.memory_space<vmem>>, %arg7: memref<1x1xf32, #tpu.memory_space<vmem>>, %arg8: memref<1x1x16xf32, #tpu.memory_space<vmem>>) attributes {dimension_semantics = [#tpu.dimension_semantics<parallel>], iteration_bounds = array<i64: 2>, scalar_prefetch = 0 : i64, scratch_operands = 0 : i64, tpu.core_type = #tpu.core_type<tc>, window_params = [{transform_indices = @transform_0, window_bounds = array<i64: 16, 32>}, {pipeline_mode = #tpu.pipeline_mode<synchronous>, transform_indices = @transform_1, window_bounds = array<i64: 32, 128>}, {pipeline_mode = #tpu.pipeline_mode<synchronous>, transform_indices = @transform_2, window_bounds = array<i64: 1, 128>}, {pipeline_mode = #tpu.pipeline_mode<synchronous>, transform_indices = @transform_3, window_bounds = array<i64: 128, 128>}, {pipeline_mode = #tpu.pipeline_mode<synchronous>, transform_indices = @transform_4, window_bounds = array<i64: 1, 128>}, {pipeline_mode = #tpu.pipeline_mode<synchronous>, transform_indices = @transform_5, window_bounds = array<i64: 1, 128>}, {pipeline_mode = #tpu.pipeline_mode<synchronous>, transform_indices = @transform_6, window_bounds = array<i64: 1, 1>}, {transform_indices = @transform_7, window_bounds = array<i64: 1, 1, 16>}]} {
    %c0 = arith.constant 0 : index
    %c0_0 = arith.constant 0 : index
    %0 = vector.load %arg1[%c0, %c0_0] : memref<16x32xbf16, #tpu.memory_space<vmem>>, vector<16x32xbf16>
    %c0_1 = arith.constant 0 : index
    %c0_2 = arith.constant 0 : index
    %1 = vector.load %arg2[%c0_1, %c0_2] : memref<32x128xbf16, #tpu.memory_space<vmem>>, vector<32x128xbf16>
    %cst = arith.constant dense<0.000000e+00> : vector<16x128xf32>
    %2 = tpu.matmul %0, %1, %cst {dimension_numbers = #tpu.dot_dimension_numbers<[1], [0], [0], [1], [0, 0, 1, 1], [], []>} : vector<16x32xbf16>, vector<32x128xbf16>, vector<16x128xf32> -> vector<16x128xf32>
    %c0_3 = arith.constant 0 : index
    %c0_4 = arith.constant 0 : index
    %3 = vector.load %arg3[%c0_3, %c0_4] : memref<1x128xf32, #tpu.memory_space<vmem>>, vector<1x128xf32>
    %4 = vector.broadcast %3 : vector<1x128xf32> to vector<16x128xf32>
    %5 = arith.addf %2, %4 : vector<16x128xf32>
    %cst_5 = arith.constant 0.000000e+00 : f32
    %6 = vector.broadcast %cst_5 : f32 to vector<16x128xf32>
    %7 = arith.maximumf %5, %6 : vector<16x128xf32>
    %8 = arith.truncf %7 : vector<16x128xf32> to vector<16x128xbf16>
    %c0_6 = arith.constant 0 : index
    %c0_7 = arith.constant 0 : index
    %9 = vector.load %arg4[%c0_6, %c0_7] : memref<128x128xbf16, #tpu.memory_space<vmem>>, vector<128x128xbf16>
    %cst_8 = arith.constant dense<0.000000e+00> : vector<16x128xf32>
    %10 = tpu.matmul %8, %9, %cst_8 {dimension_numbers = #tpu.dot_dimension_numbers<[1], [0], [0], [1], [0, 0, 1, 1], [], []>} : vector<16x128xbf16>, vector<128x128xbf16>, vector<16x128xf32> -> vector<16x128xf32>
    %c0_9 = arith.constant 0 : index
    %c0_10 = arith.constant 0 : index
    %11 = vector.load %arg5[%c0_9, %c0_10] : memref<1x128xf32, #tpu.memory_space<vmem>>, vector<1x128xf32>
    %12 = vector.broadcast %11 : vector<1x128xf32> to vector<16x128xf32>
    %13 = arith.addf %10, %12 : vector<16x128xf32>
    %cst_11 = arith.constant 0.000000e+00 : f32
    %14 = vector.broadcast %cst_11 : f32 to vector<16x128xf32>
    %15 = arith.maximumf %13, %14 : vector<16x128xf32>
    %c0_12 = arith.constant 0 : index
    %c0_13 = arith.constant 0 : index
    %16 = vector.load %arg6[%c0_12, %c0_13] : memref<1x128xbf16, #tpu.memory_space<vmem>>, vector<1x128xbf16>
    %17 = arith.truncf %15 : vector<16x128xf32> to vector<16x128xbf16>
    %cst_14 = arith.constant dense<0.000000e+00> : vector<1x16xf32>
    %18 = tpu.matmul %16, %17, %cst_14 {dimension_numbers = #tpu.dot_dimension_numbers<[1], [1], [0], [0], [0, 0, 1, 0], [], []>} : vector<1x128xbf16>, vector<16x128xbf16>, vector<1x16xf32> -> vector<1x16xf32>
    %c0_15 = arith.constant 0 : index
    %c0_16 = arith.constant 0 : index
    %19 = vector.load %arg7[%c0_15, %c0_16] : memref<1x1xf32, #tpu.memory_space<vmem>>, vector<1x1xf32>
    %20 = vector.broadcast %19 : vector<1x1xf32> to vector<1x16xf32>
    %21 = arith.addf %18, %20 : vector<1x16xf32>
    %22 = vector.shape_cast %21 : vector<1x16xf32> to vector<1x1x16xf32>
    %c0_17 = arith.constant 0 : index
    %c0_18 = arith.constant 0 : index
    %c0_19 = arith.constant 0 : index
    %23 = vector.load %arg8[%c0_17, %c0_18, %c0_19] : memref<1x1x16xf32, #tpu.memory_space<vmem>>, vector<1x1x16xf32>
    tpu.vector_store %arg8[%c0_17, %c0_18, %c0_19], %22 {strides = array<i32>} : memref<1x1x16xf32, #tpu.memory_space<vmem>>, vector<1x1x16xf32>,
    return
  }
  func.func @transform_0(%arg0: i32) -> (i32, i32) {
    %c0_i32 = arith.constant 0 : i32
    %c0_i32_0 = arith.constant 0 : i32
    return %arg0, %c0_i32 : i32, i32
  }
  func.func @transform_1(%arg0: i32) -> (i32, i32) {
    %c0_i32 = arith.constant 0 : i32
    %c0_i32_0 = arith.constant 0 : i32
    %c0_i32_1 = arith.constant 0 : i32
    return %c0_i32, %c0_i32_0 : i32, i32
  }
  func.func @transform_2(%arg0: i32) -> (i32, i32) {
    %c0_i32 = arith.constant 0 : i32
    %c0_i32_0 = arith.constant 0 : i32
    %c0_i32_1 = arith.constant 0 : i32
    return %c0_i32, %c0_i32_0 : i32, i32
  }
  func.func @transform_3(%arg0: i32) -> (i32, i32) {
    %c0_i32 = arith.constant 0 : i32
    %c0_i32_0 = arith.constant 0 : i32
    %c0_i32_1 = arith.constant 0 : i32
    return %c0_i32, %c0_i32_0 : i32, i32
  }
  func.func @transform_4(%arg0: i32) -> (i32, i32) {
    %c0_i32 = arith.constant 0 : i32
    %c0_i32_0 = arith.constant 0 : i32
    %c0_i32_1 = arith.constant 0 : i32
    return %c0_i32, %c0_i32_0 : i32, i32
  }
  func.func @transform_5(%arg0: i32) -> (i32, i32) {
    %c0_i32 = arith.constant 0 : i32
    %c0_i32_0 = arith.constant 0 : i32
    %c0_i32_1 = arith.constant 0 : i32
    return %c0_i32, %c0_i32_0 : i32, i32
  }
  func.func @transform_6(%arg0: i32) -> (i32, i32) {
    %c0_i32 = arith.constant 0 : i32
    %c0_i32_0 = arith.constant 0 : i32
    %c0_i32_1 = arith.constant 0 : i32
    return %c0_i32, %c0_i32_0 : i32, i32
  }
  func.func @transform_7(%arg0: i32) -> (i32, i32, i32) {
    %c0_i32 = arith.constant 0 : i32
    %c0_i32_0 = arith.constant 0 : i32
    %c0_i32_1 = arith.constant 0 : i32
    return %arg0, %c0_i32, %c0_i32_0 : i32, i32, i32
  }
}

</mosaic_0001>

<llo_original>
// kernel: mine_forward_prepared.1
$region0: #{mine_forward_prepared.1}
  #allocation0 [shape = 'u32[]', space=smem, size = 0x4, offset = 0x4, fixed_abs, tag = 'smem constant byte address 0x4 - core index']
  #allocation1 [shape = 'u32[144,128]{1,0:T(1,128)}', space=vmem, size = 0x12000, scoped, tag = 'internal scratch']
  #allocation2 [shape = 'f32[1,1]{1,0:T(1,128)S(1)}', space=vmem, size = 0x200, scoped, tag = 'scoped memory for mine_forward_prepared.1']
  %s0 = inlined_call_operand.vmem [shape: bf16[32,32], index: 0, kind: input, shape index: {}]
  %s1 = inlined_call_operand.vmem [shape: bf16[32,128], index: 1, kind: input, shape index: {}]
  %s2 = inlined_call_operand.vmem [shape: f32[1,128], index: 2, kind: input, shape index: {}]
  %s3 = inlined_call_operand.vmem [shape: bf16[128,128], index: 3, kind: input, shape index: {}]
  %s4 = inlined_call_operand.vmem [shape: f32[1,128], index: 4, kind: input, shape index: {}]
  %s5 = inlined_call_operand.vmem [shape: bf16[1,128], index: 5, kind: input, shape index: {}]
  %s6 = inlined_call_operand.<no memory space> [shape: f32[1,1], index: 6, kind: input, shape index: {}]
  %s7 = inlined_call_operand.vmem [shape: f32[2,1,16], index: 7, kind: output, shape index: {}]
  %s8 = sld [smem:[#allocation0]]
  $region61: #{mine_forward_prepared.1} parent=0
    _
  %s10 = ssub.s32 1, %s8
  %s11 = scalar_select 0, %s10, %s8
  %v12 = vstv %s6
  %13 = vst [vmem:[#allocation2] sm:$0x1] %v12
  loop: start=0, step=1, limit=4
  $region2: #{mine_forward_prepared.1} parent=0 // loop_pre_header
    _
  $region3: #{mine_forward_prepared.1} parent=0 // loop_header
    %s15 = sphi 0, %s19
    %p16 = scmp.ge.s32.totalorder %s15, 4
    %s25 = sphi 0, %s27
    %s28 = sphi 0, %s25
    %s29 = sphi 0, %s28
    %s45 = sphi 0, %s29
    %s49 = sphi 0, %s49
    %s51 = sphi 0, %s49
    %s52 = sphi 0, %s51
    %s66 = sphi 0, %s52
    %s70 = sphi 0, %s70
    %s72 = sphi 0, %s70
    %s73 = sphi 0, %s72
    %s87 = sphi 0, %s73
    %s91 = sphi 0, %s91
    %s93 = sphi 0, %s91
    %s94 = sphi 0, %s93
    %s108 = sphi 0, %s94
    %s112 = sphi 0, %s112
    %s114 = sphi 0, %s112
    %s115 = sphi 0, %s114
    %s129 = sphi 0, %s115
    %s133 = sphi 0, %s133
    %s135 = sphi 0, %s133
    %s136 = sphi 0, %s135
    %s150 = sphi 0, %s136
    %s154 = sphi 0, %s154
    %s156 = sphi 0, %s154
    %s157 = sphi 0, %s156
    %s171 = sphi 0, %s157
    %s177 = sphi 0, %s179
    %s180 = sphi 0, %s177
    %s181 = sphi 0, %s180
    %s197 = sphi 0, %s181
  $region4: #{mine_forward_prepared.1} parent=0 // loop_header_branch
    %18 = sbr.rel (%p16) target = $region8
  $region5: #{mine_forward_prepared.1} parent=0 // loop_body
    %s20 = ssub.s32 %s15, 1
    %s21 = ssub.s32 %s15, 2
    %s22 = sadd.s32 %s15, 1
    %s23 = ssub.s32 %s15, %s22
    %p24 = scmp.eq.s32.totalorder %s23, 0
    %s26 = sadd.s32 %s25, 1
    %s27 = scalar_select %p24, %s25, %s26
    %p30 = pneg %p24
    %p31 = scmp.eq.s32.totalorder %s15, 1
    %p32 = por %p30, %p31
    %p33 = scmp.ne.s32.totalorder %s25, %s28
    %p34 = scmp.eq.s32.totalorder %s15, 0
    %p35 = por %p33, %p34
    %p36 = scmp.ne.s32.totalorder %s25, %s28
    %p37 = scmp.eq.s32.totalorder %s20, 1
    %p38 = por %p36, %p37
    %p39 = scmp.ne.s32.totalorder %s28, %s29
    %p40 = scmp.eq.s32.totalorder %s20, 0
    %p41 = por %p39, %p40
    %p42 = scmp.ne.s32.totalorder %s28, %s29
    %p43 = scmp.eq.s32.totalorder %s21, 1
    %p44 = por %p42, %p43
    %p46 = scmp.ne.s32.totalorder %s29, %s45
    %p47 = scmp.eq.s32.totalorder %s21, 0
    %p48 = por %p46, %p47
    %s50 = sadd.s32 %s49, 1
    %p53 = scmp.eq.s32.totalorder %s15, 1
    %p54 = scmp.ne.s32.totalorder %s49, %s51
    %p55 = scmp.eq.s32.totalorder %s15, 0
    %p56 = por %p54, %p55
    %p57 = scmp.ne.s32.totalorder %s49, %s51
    %p58 = scmp.eq.s32.totalorder %s20, 1
    %p59 = por %p57, %p58
    %p60 = scmp.ne.s32.totalorder %s51, %s52
    %p61 = scmp.eq.s32.totalorder %s20, 0
    %p62 = por %p60, %p61
    %p63 = scmp.ne.s32.totalorder %s51, %s52
    %p64 = scmp.eq.s32.totalorder %s21, 1
    %p65 = por %p63, %p64
    %p67 = scmp.ne.s32.totalorder %s52, %s66
    %p68 = scmp.eq.s32.totalorder %s21, 0
    %p69 = por %p67, %p68
    %s71 = sadd.s32 %s70, 1
    %p74 = scmp.eq.s32.totalorder %s15, 1
    %p75 = scmp.ne.s32.totalorder %s70, %s72
    %p76 = scmp.eq.s32.totalorder %s15, 0
    %p77 = por %p75, %p76
    %p78 = scmp.ne.s32.totalorder %s70, %s72
    %p79 = scmp.eq.s32.totalorder %s20, 1
    %p80 = por %p78, %p79
    %p81 = scmp.ne.s32.totalorder %s72, %s73
    %p82 = scmp.eq.s32.totalorder %s20, 0
    %p83 = por %p81, %p82
    %p84 = scmp.ne.s32.totalorder %s72, %s73
    %p85 = scmp.eq.s32.totalorder %s21, 1
    %p86 = por %p84, %p85
    %p88 = scmp.ne.s32.totalorder %s73, %s87
    %p89 = scmp.eq.s32.totalorder %s21, 0
    %p90 = por %p88, %p89
    %s92 = sadd.s32 %s91, 1
    %p95 = scmp.eq.s32.totalorder %s15, 1
    %p96 = scmp.ne.s32.totalorder %s91, %s93
    %p97 = scmp.eq.s32.totalorder %s15, 0
    %p98 = por %p96, %p97
    %p99 = scmp.ne.s32.totalorder %s91, %s93
    %p100 = scmp.eq.s32.totalorder %s20, 1
    %p101 = por %p99, %p100
    %p102 = scmp.ne.s32.totalorder %s93, %s94
    %p103 = scmp.eq.s32.totalorder %s20, 0
    %p104 = por %p102, %p103
    %p105 = scmp.ne.s32.totalorder %s93, %s94
    %p106 = scmp.eq.s32.totalorder %s21, 1
    %p107 = por %p105, %p106
    %p109 = scmp.ne.s32.totalorder %s94, %s108
    %p110 = scmp.eq.s32.totalorder %s21, 0
    %p111 = por %p109, %p110
    %s113 = sadd.s32 %s112, 1
    %p116 = scmp.eq.s32.totalorder %s15, 1
    %p117 = scmp.ne.s32.totalorder %s112, %s114
    %p118 = scmp.eq.s32.totalorder %s15, 0
    %p119 = por %p117, %p118
    %p120 = scmp.ne.s32.totalorder %s112, %s114
    %p121 = scmp.eq.s32.totalorder %s20, 1
    %p122 = por %p120, %p121
    %p123 = scmp.ne.s32.totalorder %s114, %s115
    %p124 = scmp.eq.s32.totalorder %s20, 0
    %p125 = por %p123, %p124
    %p126 = scmp.ne.s32.totalorder %s114, %s115
    %p127 = scmp.eq.s32.totalorder %s21, 1
    %p128 = por %p126, %p127
    %p130 = scmp.ne.s32.totalorder %s115, %s129
    %p131 = scmp.eq.s32.totalorder %s21, 0
    %p132 = por %p130, %p131
    %s134 = sadd.s32 %s133, 1
    %p137 = scmp.eq.s32.totalorder %s15, 1
    %p138 = scmp.ne.s32.totalorder %s133, %s135
    %p139 = scmp.eq.s32.totalorder %s15, 0
    %p140 = por %p138, %p139
    %p141 = scmp.ne.s32.totalorder %s133, %s135
    %p142 = scmp.eq.s32.totalorder %s20, 1
    %p143 = por %p141, %p142
    %p144 = scmp.ne.s32.totalorder %s135, %s136
    %p145 = scmp.eq.s32.totalorder %s20, 0
    %p146 = por %p144, %p145
    %p147 = scmp.ne.s32.totalorder %s135, %s136
    %p148 = scmp.eq.s32.totalorder %s21, 1
    %p149 = por %p147, %p148
    %p151 = scmp.ne.s32.totalorder %s136, %s150
    %p152 = scmp.eq.s32.totalorder %s21, 0
    %p153 = por %p151, %p152
    %s155 = sadd.s32 %s154, 1
    %p158 = scmp.eq.s32.totalorder %s15, 1
    %p159 = scmp.ne.s32.totalorder %s154, %s156
    %p160 = scmp.eq.s32.totalorder %s15, 0
    %p161 = por %p159, %p160
    %p162 = scmp.ne.s32.totalorder %s154, %s156
    %p163 = scmp.eq.s32.totalorder %s20, 1
    %p164 = por %p162, %p163
    %p165 = scmp.ne.s32.totalorder %s156, %s157
    %p166 = scmp.eq.s32.totalorder %s20, 0
    %p167 = por %p165, %p166
    %p168 = scmp.ne.s32.totalorder %s156, %s157
    %p169 = scmp.eq.s32.totalorder %s21, 1
    %p170 = por %p168, %p169
    %p172 = scmp.ne.s32.totalorder %s157, %s171
    %p173 = scmp.eq.s32.totalorder %s21, 0
    %p174 = por %p172, %p173
    %s175 = ssub.s32 %s15, %s22
    %p176 = scmp.eq.s32.totalorder %s175, 0
    %s178 = sadd.s32 %s177, 1
    %s179 = scalar_select %p176, %s177, %s178
    %p182 = pneg %p176
    %p183 = scmp.eq.s32.totalorder %s15, 1
    %p184 = por %p182, %p183
    %p185 = scmp.ne.s32.totalorder %s177, %s180
    %p186 = scmp.eq.s32.totalorder %s15, 0
    %p187 = por %p185, %p186
    %p188 = scmp.ne.s32.totalorder %s177, %s180
    %p189 = scmp.eq.s32.totalorder %s20, 1
    %p190 = por %p188, %p189
    %p191 = scmp.ne.s32.totalorder %s180, %s181
    %p192 = scmp.eq.s32.totalorder %s20, 0
    %p193 = por %p191, %p192
    %p194 = scmp.ne.s32.totalorder %s180, %s181
    %p195 = scmp.eq.s32.totalorder %s21, 1
    %p196 = por %p194, %p195
    %p198 = scmp.ne.s32.totalorder %s181, %s197
    %p199 = scmp.eq.s32.totalorder %s21, 0
    %p200 = por %p198, %p199
    %p201 = scmp.le.s32.totalorder 1, %s15
    %p202 = scmp.lt.s32.totalorder %s15, 3
    %p203 = pnand %p201, %p202
    %p204 = pneg %p203
    // Predicated region
    $region9: #{mine_forward_prepared.1} parent=5 // pred_check
      _
    $region10: #{mine_forward_prepared.1} parent=5 // pred_check_branch
      %206 = sbr.rel (%p203) target = $region12
    $region11: #{mine_forward_prepared.1} parent=5 // pred_region
      %s207 = ssub.s32 %s15, 1
      // Predicated region
      $region13: #{mine_forward_prepared.1} parent=11 // pred_check
        %p208 = pneg %p62
      $region14: #{mine_forward_prepared.1} parent=11 // pred_check_branch
        %210 = sbr.rel (%p208) target = $region16
      $region15: #{mine_forward_prepared.1} parent=11 // pred_region
        _
      $region16: #{mine_forward_prepared.1} parent=11 // pred_fallthru
        _
      // Predicated region
      $region17: #{mine_forward_prepared.1} parent=11 // pred_check
        %p211 = pneg %p83
      $region18: #{mine_forward_prepared.1} parent=11 // pred_check_branch
        %213 = sbr.rel (%p211) target = $region20
      $region19: #{mine_forward_prepared.1} parent=11 // pred_region
        _
      $region20: #{mine_forward_prepared.1} parent=11 // pred_fallthru
        _
      // Predicated region
      $region21: #{mine_forward_prepared.1} parent=11 // pred_check
        %p214 = pneg %p104
      $region22: #{mine_forward_prepared.1} parent=11 // pred_check_branch
        %216 = sbr.rel (%p214) target = $region24
      $region23: #{mine_forward_prepared.1} parent=11 // pred_region
        _
      $region24: #{mine_forward_prepared.1} parent=11 // pred_fallthru
        _
      // Predicated region
      $region25: #{mine_forward_prepared.1} parent=11 // pred_check
        %p217 = pneg %p125
      $region26: #{mine_forward_prepared.1} parent=11 // pred_check_branch
        %219 = sbr.rel (%p217) target = $region28
      $region27: #{mine_forward_prepared.1} parent=11 // pred_region
        _
      $region28: #{mine_forward_prepared.1} parent=11 // pred_fallthru
        _
      // Predicated region
      $region29: #{mine_forward_prepared.1} parent=11 // pred_check
        %p220 = pneg %p146
      $region30: #{mine_forward_prepared.1} parent=11 // pred_check_branch
        %222 = sbr.rel (%p220) target = $region32
      $region31: #{mine_forward_prepared.1} parent=11 // pred_region
        _
      $region32: #{mine_forward_prepared.1} parent=11 // pred_fallthru
        _
      // Predicated region
      $region33: #{mine_forward_prepared.1} parent=11 // pred_check
        %p223 = pneg %p167
      $region34: #{mine_forward_prepared.1} parent=11 // pred_check_branch
        %225 = sbr.rel (%p223) target = $region36
      $region35: #{mine_forward_prepared.1} parent=11 // pred_region
        _
      $region36: #{mine_forward_prepared.1} parent=11 // pred_fallthru
        _
    $region12: #{mine_forward_prepared.1} parent=5 // pred_fallthru
      _
    %p226 = scmp.lt.s32.totalorder %s15, 2
    // Predicated region
    $region37: #{mine_forward_prepared.1} parent=5 // pred_check
      %p227 = pneg %p226
    $region38: #{mine_forward_prepared.1} parent=5 // pred_check_branch
      %229 = sbr.rel (%p227) target = $region40
    $region39: #{mine_forward_prepared.1} parent=5 // pred_region
      // Predicated region
      $region41: #{mine_forward_prepared.1} parent=39 // pred_check
        %p230 = pneg %p35
      $region42: #{mine_forward_prepared.1} parent=39 // pred_check_branch
        %232 = sbr.rel (%p230) target = $region44
      $region43: #{mine_forward_prepared.1} parent=39 // pred_region
        %s233 = smul.u32 2, %s15
        %p234 = scmp.lt.s32.totalorder %s233, 3
        %s235 = scalar_select %p234, %s233, 3
        %s236 = smul.addr %s235, 4
        %s237 = scalar_lea.vmem %s0, %s236
        %s238 = smul.u32 2, %s15
      $region44: #{mine_forward_prepared.1} parent=39 // pred_fallthru
        _
    $region40: #{mine_forward_prepared.1} parent=5 // pred_fallthru
      _
    %p239 = scmp.le.s32.totalorder 1, %s15
    %p240 = scmp.lt.s32.totalorder %s15, 3
    %p241 = pnand %p239, %p240
    %p242 = pneg %p241
    // Predicated region
    $region45: #{mine_forward_prepared.1} parent=5 // pred_check
      _
    $region46: #{mine_forward_prepared.1} parent=5 // pred_check_branch
      %244 = sbr.rel (%p241) target = $region48
    $region47: #{mine_forward_prepared.1} parent=5 // pred_region
      %s245 = ssub.s32 %s15, 1
      %s246 = smul.u32 2, %s20
      %p247 = scmp.lt.s32.totalorder %s246, 3
      %s248 = scalar_select %p247, %s246, 3
      %s249 = smul.addr %s248, 4
      %s250 = scalar_lea.vmem %s0, %s249
      %p251 = pneg %p41
      %p252 = pneg %p38
      %p253 = pneg %p62
      %p254 = pneg %p59
      %p255 = pneg %p83
      %p256 = pneg %p80
      %p257 = pneg %p104
      %p258 = pneg %p101
      %p259 = pneg %p125
      %p260 = pneg %p122
      %p261 = pneg %p146
      %p262 = pneg %p143
      %p263 = pneg %p167
      %p264 = pneg %p164
      %p265 = pneg %p193
      %p266 = pneg %p190
      %p267 = scmp.lt.s32.totalorder %s20, 1
      %s268 = scalar_select %p267, %s20, 1
      %s269 = scalar_lea.vmem %s7, %s268
      %s270 = smul.u32 2, %s20
      %p271 = scmp.lt.s32.totalorder %s270, 3
      %s272 = scalar_select %p271, %s270, 3
      %s273 = smul.addr %s272, 4
      %s274 = scalar_lea.vmem %s0, %s273
      %s275 = smul.u32 2, %s20
      %p276 = scmp.lt.s32.totalorder %s20, 1
      %s277 = scalar_select %p276, %s20, 1
      %s278 = scalar_lea.vmem %s7, %s277
      %v280 = vld [vmem:[%s274] sm:$0xf]
      %v281 = vld [vmem:[%s274 + $0x4] sm:$0xf]
      %v282 = vld [vmem:[%s1] sm:$0xf]
      %v283 = vld [vmem:[%s1 + $0x4] sm:$0xf]
      %v284 = vld [vmem:[%s1 + $0x8] sm:$0xf]
      %v285 = vld [vmem:[%s1 + $0xc] sm:$0xf]
      %v286 = vld [vmem:[%s2] sm:$0x1]
      %v288 = vlaneseq
      %v289 = vshrl.u32 %v288, 7
      %v290 = vsub.s32 0, %v289
      %v291 = vrot.slane %v286, %v290
      %v295 = vunpack.c.l.b16 %v280
      %v296 = vunpack.c.l.b16 %v281
      %v297 = vpack.c.b16 %v296, %v295
      %v302 = vunpack.c.l.b16 %v282
      %v303 = vunpack.c.l.b16 %v283
      %v304 = vunpack.c.l.b16 %v284
      %v305 = vunpack.c.l.b16 %v285
      %v306 = vpack.c.b16 %v303, %v302
      %v307 = vpack.c.b16 %v305, %v304
      %vm310 = vcmask 261120
      %v312 = vsel %vm310, %v297, 0
      %314 = vmatprep.subr.bf16.mxu0 0
      %315 = vmatpush1.bf16.msra.mxu0 %v306
      %316 = vmatprep.subr.bf16.mxu0 0
      %317 = vmatpush1.bf16.msra.mxu0 %v307
      %318 = vmatprep.subr.bf16.mxu0 0
      %319 = vmatpush1.bf16.msra.mxu0 0
      %320 = vmatprep.subr.bf16.mxu0 0
      %321 = vmatpush1.bf16.msra.mxu0 0
      %322 = vmatprep.subr.bf16.mxu0 0
      %323 = vmatpush1.bf16.msra.mxu0 0
      %324 = vmatprep.subr.bf16.mxu0 0
      %325 = vmatpush1.bf16.msra.mxu0 0
      %326 = vmatprep.subr.bf16.mxu0 0
      %327 = vmatpush1.bf16.msra.mxu0 0
      %328 = vmatprep.subr.bf16.mxu0 0
      %329 = vmatpush1.bf16.msra.mxu0 0
      %330 = vmatprep.subr.bf16.mxu0 0
      %331 = vmatpush1.bf16.msra.mxu0 0
      %332 = vmatprep.subr.bf16.mxu0 0
      %333 = vmatpush1.bf16.msra.mxu0 0
      %334 = vmatprep.subr.bf16.mxu0 0
      %335 = vmatpush1.bf16.msra.mxu0 0
      %336 = vmatprep.subr.bf16.mxu0 0
      %337 = vmatpush1.bf16.msra.mxu0 0
      %338 = vmatprep.subr.bf16.mxu0 0
      %339 = vmatpush1.bf16.msra.mxu0 0
      %340 = vmatprep.subr.bf16.mxu0 0
      %341 = vmatpush1.bf16.msra.mxu0 0
      %342 = vmatprep.subr.bf16.mxu0 0
      %343 = vmatpush1.bf16.msra.mxu0 0
      %344 = vmatprep.subr.bf16.mxu0 0
      %345 = vmatpush1.bf16.msra.mxu0 0
      %346 = vmatprep.mubr.bf16.mxu0 0
      %347 = vmatmul.mubr.bf16.gmra.mrb[0].mxu0 %v312
      %v348 = vpop.f32.mrb[0].mxu0
      %v349 = vadd.f32 %v291, %v348
      %v350 = vpop.f32.mrb[0].mxu0
      %v351 = vpop.f32.mrb[0].mxu0
      %v352 = vadd.f32 %v291, %v351
      %v353 = vpop.f32.mrb[0].mxu0
      %354 = vdwg.mxu0
      %v355 = vmax.f32 %v349, 0.0
      %v356 = vmax.f32 %v352, 0.0
      %v357 = vpack.c.bf16 %v356, %v355
      %v358 = vld [vmem:[%s3] sm:$0xf]
      %v359 = vld [vmem:[%s3 + $0x4] sm:$0xf]
      %v360 = vld [vmem:[%s3 + $0x8] sm:$0xf]
      %v361 = vld [vmem:[%s3 + $0xc] sm:$0xf]
      %v362 = vld [vmem:[%s3 + $0x10] sm:$0xf]
      %v363 = vld [vmem:[%s3 + $0x14] sm:$0xf]
      %v364 = vld [vmem:[%s3 + $0x18] sm:$0xf]
      %v365 = vld [vmem:[%s3 + $0x1c] sm:$0xf]
      %v366 = vld [vmem:[%s3 + $0x20] sm:$0xf]
      %v367 = vld [vmem:[%s3 + $0x24] sm:$0xf]
      %v368 = vld [vmem:[%s3 + $0x28] sm:$0xf]
      %v369 = vld [vmem:[%s3 + $0x2c] sm:$0xf]
      %v370 = vld [vmem:[%s3 + $0x30] sm:$0xf]
      %v371 = vld [vmem:[%s3 + $0x34] sm:$0xf]
      %v372 = vld [vmem:[%s3 + $0x38] sm:$0xf]
      %v373 = vld [vmem:[%s3 + $0x3c] sm:$0xf]
      %v374 = vld [vmem:[%s4] sm:$0x1]
      %v376 = vlaneseq
      %v377 = vshrl.u32 %v376, 7
      %v378 = vsub.s32 0, %v377
      %v379 = vrot.slane %v374, %v378
      %v397 = vunpack.c.l.b16 %v358
      %v398 = vunpack.c.l.b16 %v359
      %v399 = vunpack.c.l.b16 %v360
      %v400 = vunpack.c.l.b16 %v361
      %v401 = vunpack.c.l.b16 %v362
      %v402 = vunpack.c.l.b16 %v363
      %v403 = vunpack.c.l.b16 %v364
      %v404 = vunpack.c.l.b16 %v365
      %v405 = vunpack.c.l.b16 %v366
      %v406 = vunpack.c.l.b16 %v367
      %v407 = vunpack.c.l.b16 %v368
      %v408 = vunpack.c.l.b16 %v369
      %v409 = vunpack.c.l.b16 %v370
      %v410 = vunpack.c.l.b16 %v371
      %v411 = vunpack.c.l.b16 %v372
      %v412 = vunpack.c.l.b16 %v373
      %v413 = vpack.c.b16 %v398, %v397
      %v414 = vpack.c.b16 %v400, %v399
      %v415 = vpack.c.b16 %v402, %v401
      %v416 = vpack.c.b16 %v404, %v403
      %v417 = vpack.c.b16 %v406, %v405
      %v418 = vpack.c.b16 %v408, %v407
      %v419 = vpack.c.b16 %v410, %v409
      %v420 = vpack.c.b16 %v412, %v411
      %429 = vmatprep.subr.bf16.mxu0 0
      %430 = vmatpush1.bf16.msra.mxu0 %v413
      %431 = vmatprep.subr.bf16.mxu0 0
      %432 = vmatpush1.bf16.msra.mxu0 %v414
      %433 = vmatprep.subr.bf16.mxu0 0
      %434 = vmatpush1.bf16.msra.mxu0 %v415
      %435 = vmatprep.subr.bf16.mxu0 0
      %436 = vmatpush1.bf16.msra.mxu0 %v416
      %437 = vmatprep.subr.bf16.mxu0 0
      %438 = vmatpush1.bf16.msra.mxu0 %v417
      %439 = vmatprep.subr.bf16.mxu0 0
      %440 = vmatpush1.bf16.msra.mxu0 %v418
      %441 = vmatprep.subr.bf16.mxu0 0
      %442 = vmatpush1.bf16.msra.mxu0 %v419
      %443 = vmatprep.subr.bf16.mxu0 0
      %444 = vmatpush1.bf16.msra.mxu0 %v420
      %445 = vmatprep.subr.bf16.mxu0 0
      %446 = vmatpush1.bf16.msra.mxu0 0
      %447 = vmatprep.subr.bf16.mxu0 0
      %448 = vmatpush1.bf16.msra.mxu0 0
      %449 = vmatprep.subr.bf16.mxu0 0
      %450 = vmatpush1.bf16.msra.mxu0 0
      %451 = vmatprep.subr.bf16.mxu0 0
      %452 = vmatpush1.bf16.msra.mxu0 0
      %453 = vmatprep.subr.bf16.mxu0 0
      %454 = vmatpush1.bf16.msra.mxu0 0
      %455 = vmatprep.subr.bf16.mxu0 0
      %456 = vmatpush1.bf16.msra.mxu0 0
      %457 = vmatprep.subr.bf16.mxu0 0
      %458 = vmatpush1.bf16.msra.mxu0 0
      %459 = vmatprep.subr.bf16.mxu0 0
      %460 = vmatpush1.bf16.msra.mxu0 0
      %461 = vmatprep.mubr.bf16.mxu0 0
      %462 = vmatmul.mubr.bf16.gmra.mrb[0].mxu0 %v357
      %v463 = vpop.f32.mrb[0].mxu0
      %v464 = vadd.f32 %v379, %v463
      %v465 = vpop.f32.mrb[0].mxu0
      %v466 = vpop.f32.mrb[0].mxu0
      %v467 = vadd.f32 %v379, %v466
      %v468 = vpop.f32.mrb[0].mxu0
      %469 = vdwg.mxu0
      %v470 = vmax.f32 %v464, 0.0
      %v471 = vmax.f32 %v467, 0.0
      %v472 = vld [vmem:[%s5] sm:$0x1]
      %v473 = vpack.c.bf16 %v471, %v470
      %v474 = vld [vmem:[#allocation2] sm:$0x1]
      %476 = vset.pattern.permute.xlu0 0
      %477 = vperm.xlu0 %476, %v474
      %v478 = vpop.permute.xlu0 %477
      %v480 = vlaneseq
      %v481 = vshrl.u32 %v480, 7
      %v482 = vsub.s32 0, %v481
      %v483 = vrot.slane %v478, %v482
      %484 = vmatprep.subr.bf16.mxu0 0
      %485 = vmatpush1.bf16.xpose.msra.mxu0 %v473
      %486 = vmatprep.subr.bf16.mxu0 0
      %487 = vmatpush1.bf16.xpose.msra.mxu0 0
      %488 = vmatprep.subr.bf16.mxu0 0
      %489 = vmatpush1.bf16.xpose.msra.mxu0 0
      %490 = vmatprep.subr.bf16.mxu0 0
      %491 = vmatpush1.bf16.xpose.msra.mxu0 0
      %492 = vmatprep.subr.bf16.mxu0 0
      %493 = vmatpush1.bf16.xpose.msra.mxu0 0
      %494 = vmatprep.subr.bf16.mxu0 0
      %495 = vmatpush1.bf16.xpose.msra.mxu0 0
      %496 = vmatprep.subr.bf16.mxu0 0
      %497 = vmatpush1.bf16.xpose.msra.mxu0 0
      %498 = vmatprep.subr.bf16.mxu0 0
      %499 = vmatpush1.bf16.xpose.msra.mxu0 0
      %500 = vmatprep.subr.bf16.mxu0 0
      %501 = vmatpush1.bf16.xpose.msra.mxu0 0
      %502 = vmatprep.subr.bf16.mxu0 0
      %503 = vmatpush1.bf16.xpose.msra.mxu0 0
      %504 = vmatprep.subr.bf16.mxu0 0
      %505 = vmatpush1.bf16.xpose.msra.mxu0 0
      %506 = vmatprep.subr.bf16.mxu0 0
      %507 = vmatpush1.bf16.xpose.msra.mxu0 0
      %508 = vmatprep.subr.bf16.mxu0 0
      %509 = vmatpush1.bf16.xpose.msra.mxu0 0
      %510 = vmatprep.subr.bf16.mxu0 0
      %511 = vmatpush1.bf16.xpose.msra.mxu0 0
      %512 = vmatprep.subr.bf16.mxu0 0
      %513 = vmatpush1.bf16.xpose.msra.mxu0 0
      %514 = vmatprep.subr.bf16.mxu0 0
      %515 = vmatpush1.bf16.xpose.msra.mxu0 0
      %516 = vmatprep.mubr.bf16.mxu0 0
      %517 = vmatmul.mubr.bf16.gmra.mrb[0].mxu0 %v472
      %v518 = vpop.f32.mrb[0].mxu0
      %v519 = vadd.f32 %v483, %v518
      %v520 = vpop.f32.mrb[0].mxu0
      %v521 = vpop.f32.mrb[0].mxu0
      %v522 = vpop.f32.mrb[0].mxu0
      %523 = vdwg.mxu0
      %vm524 = vcmask 122880
      %525 = vst.msk [vmem:[%s278] sm:$0x1] %vm524, %v519
      %p526 = scmp.lt.s32.totalorder %s20, 1
      %s527 = scalar_select %p526, %s20, 1
      %s528 = scalar_lea.vmem %s7, %s527
      // Predicated region
      $region49: #{mine_forward_prepared.1} parent=47 // pred_check
        %p529 = pneg %p190
      $region50: #{mine_forward_prepared.1} parent=47 // pred_check_branch
        %531 = sbr.rel (%p529) target = $region52
      $region51: #{mine_forward_prepared.1} parent=47 // pred_region
        _
      $region52: #{mine_forward_prepared.1} parent=47 // pred_fallthru
        _
    $region48: #{mine_forward_prepared.1} parent=5 // pred_fallthru
      _
    %p532 = scmp.le.s32.totalorder 2, %s15
    // Predicated region
    $region53: #{mine_forward_prepared.1} parent=5 // pred_check
      %p533 = pneg %p532
    $region54: #{mine_forward_prepared.1} parent=5 // pred_check_branch
      %535 = sbr.rel (%p533) target = $region56
    $region55: #{mine_forward_prepared.1} parent=5 // pred_region
      %s536 = ssub.s32 %s15, 2
      // Predicated region
      $region57: #{mine_forward_prepared.1} parent=55 // pred_check
        %p537 = pneg %p196
      $region58: #{mine_forward_prepared.1} parent=55 // pred_check_branch
        %539 = sbr.rel (%p537) target = $region60
      $region59: #{mine_forward_prepared.1} parent=55 // pred_region
        %p540 = scmp.lt.s32.totalorder %s21, 1
        %s541 = scalar_select %p540, %s21, 1
        %s542 = scalar_lea.vmem %s7, %s541
      $region60: #{mine_forward_prepared.1} parent=55 // pred_fallthru
        _
    $region56: #{mine_forward_prepared.1} parent=5 // pred_fallthru
      _
  $region6: #{mine_forward_prepared.1} parent=0 // loop_footer
    %s19 = sadd.s32 1, %s15
  $region7: #{mine_forward_prepared.1} parent=0 // loop_footer_branch
    %14 = sbr.rel target = $region3
  $region8: #{mine_forward_prepared.1} parent=0 // loop_exit
    _

</llo_original>
